<compile_context>
chip_gen: v7x
topology: tpu7x:2x2x1
jax: 0.10.0
libtpu: 0.0.40
codegen_flags: <defaults>
</compile_context>

<pallas_src>
import numpy as np
import jax
import jax.numpy as jnp
from jax.experimental import pallas as pl
from jax.experimental.pallas import tpu as pltpu


def _vmem_capacity_bytes():
    try:
        return int(pltpu.get_tpu_info().vmem_capacity_bytes)
    except Exception:
        return 64 * 1024 * 1024  # conservative (v7x-sized) fallback


def _choose_row_tile(B, D, in_itemsize, q_itemsize, budget_bytes):
    """Largest row tile (multiple of 8, dividing B) whose pipeline footprint fits."""
    if B % 8 != 0:
        # TODO(synk): odd batch sizes fall back to a single (possibly sub-8) row tile.
        return B
    # Per tile-row VMEM: student + 2 teacher slices (double buffered) + 2 q scratches.
    bytes_per_row = D * (6 * in_itemsize + 2 * q_itemsize)
    max_rows = max(8, budget_bytes // max(bytes_per_row, 1))
    cands = [t for t in range(8, B + 1, 8) if B % t == 0]
    fitting = [t for t in cands if t <= max_rows] or [8]
    tb = max(fitting)
    # Prefer >= 2 row tiles so the 'parallel' row axis can feed both v7x TensorCores.
    if tb == B and B >= 16:
        halves = [t for t in fitting if t <= B // 2]
        if halves:
            tb = max(halves)
    return tb


def make_dino_loss_kernel(student_temp):
    """Pallas kernel closure; grid = (num_row_tiles, ncrops) with crops innermost."""
    inv_student_temp = 1.0 / float(student_temp)

    def kernel(inv_temp_ref, student_ref, teacher0_ref, teacher1_ref, center_ref,
               loss_rows_ref, center_part_ref, q0_scr, qsum_scr):
        v = pl.program_id(1)  # crop index within this row tile ('arbitrary' axis)

        # Student log-softmax for this (row tile, crop): computed exactly once.
        s = student_ref[...].astype(jnp.float32) * inv_student_temp          # (tb, D)
        s = s - jnp.max(s, axis=-1, keepdims=True)
        logp = s - jnp.log(jnp.sum(jnp.exp(s), axis=-1, keepdims=True))      # (tb, D)

        # ---- once per row tile: teacher softmax + partial center sum ----------
        @pl.when(v == 0)
        def _first_crop():
            t0 = teacher0_ref[...].astype(jnp.float32)                       # (tb, D)
            t1 = teacher1_ref[...].astype(jnp.float32)                       # (tb, D)
            center = center_ref[...].astype(jnp.float32)                     # (1, D)
            inv_temp = inv_temp_ref[0, 0]

            # Partial batch-center sum (raw teacher rows of this tile, both views);
            # cross-tile reduce + EMA happen in the wrapper epilogue.
            part = (jnp.sum(t0, axis=0, keepdims=True)
                    + jnp.sum(t1, axis=0, keepdims=True))                    # (1, D)
            center_part_ref[...] = part.reshape(center_part_ref.shape)

            def _softmax(x):
                x = (x - center) * inv_temp
                x = x - jnp.max(x, axis=-1, keepdims=True)
                e = jnp.exp(x)
                return e * pl.reciprocal(jnp.sum(e, axis=-1, keepdims=True),
                                         approx=True)

            q0 = _softmax(t0)
            q1 = _softmax(t1)
            q0_scr[...] = q0.astype(q0_scr.dtype)            # read back at crop 1
            qsum_scr[...] = (q0 + q1).astype(qsum_scr.dtype)  # read back at crops >= 2

            # Crop 0 pairs only with teacher view 1 (the v == iq term is skipped).
            # Sign/normalization folded into the wrapper epilogue.
            loss_rows_ref[...] = jnp.sum(q1 * logp, axis=-1, keepdims=True)   # (tb, 1)

        # ---- remaining crops: exactly one multiply + lane reduce each ----------
        @pl.when(v == 1)
        def _second_crop():  # pairs only with teacher view 0
            loss_rows_ref[...] += jnp.sum(q0_scr[...] * logp, axis=-1, keepdims=True)

        @pl.when(v >= 2)
        def _local_crops():  # pairs with both teacher views
            loss_rows_ref[...] += jnp.sum(qsum_scr[...] * logp, axis=-1, keepdims=True)

    return kernel


class DINOLossPallas:
    def __init__(self, out_dim, ncrops, warmup_teacher_temp, teacher_temp,
                 warmup_teacher_temp_epochs, nepochs,
                 student_temp=0.1, center_momentum=0.9,
                 q_scratch_dtype=jnp.bfloat16):
        assert ncrops >= 2
        self.out_dim = out_dim
        self.ncrops = ncrops
        self.student_temp = student_temp
        self.center_momentum = center_momentum
        # bf16 teacher-probability scratch halves VMEM + load bandwidth (v6e/v7x);
        # pass jnp.float32 on v5e (no native bf16 VALU).
        self.q_scratch_dtype = q_scratch_dtype
        self.center = jnp.zeros((1, out_dim), jnp.float32)
        self.teacher_temp_schedule = np.concatenate((
            np.linspace(warmup_teacher_temp, teacher_temp,
                        warmup_teacher_temp_epochs),
            np.ones(nepochs - warmup_teacher_temp_epochs) * teacher_temp,
        ))

    def __call__(self, student_output, teacher_output, epoch):
        D = self.out_dim
        n_student = student_output.shape[0]
        assert n_student % self.ncrops == 0
        B = n_student // self.ncrops
        assert teacher_output.shape == (2 * B, D)
        n_loss_terms = 2 * (self.ncrops - 1)

        cap = _vmem_capacity_bytes()
        tile_budget = int(cap * 0.6)                        # sizing budget w/ headroom
        vmem_limit = min(int(cap * 0.85), 100 * 1024 * 1024)

        in_itemsize = jnp.dtype(student_output.dtype).itemsize
        q_itemsize = jnp.dtype(self.q_scratch_dtype).itemsize
        tb = _choose_row_tile(B, D, in_itemsize, q_itemsize, tile_budget)
        nrt = B // tb                                        # number of row tiles

        inv_temp = jnp.asarray(
            [[1.0 / float(self.teacher_temp_schedule[epoch])]], dtype=jnp.float32)

        kernel = make_dino_loss_kernel(self.student_temp)

        grid_spec = pltpu.PrefetchScalarGridSpec(
            num_scalar_prefetch=0,
            grid=(nrt, self.ncrops),   # rows outer ('parallel'), crops inner ('arbitrary')
            in_specs=[
                pl.BlockSpec(memory_space=pltpu.MemorySpace.SMEM),        # 1/temp (1,1)
                pl.BlockSpec((tb, D), lambda r, v: (v * nrt + r, 0)),     # student crop tile
                pl.BlockSpec((tb, D), lambda r, v: (r, 0)),               # teacher view-0 rows
                pl.BlockSpec((tb, D), lambda r, v: (nrt + r, 0)),         # teacher view-1 rows
                pl.BlockSpec((1, D), lambda r, v: (0, 0)),                # center (resident)
            ],
            out_specs=(
                pl.BlockSpec((tb, 1), lambda r, v: (r, 0)),               # per-row loss acc
                pl.BlockSpec((1, 1, D), lambda r, v: (r, 0, 0)),          # per-tile teacher sum
            ),
            scratch_shapes=[
                pltpu.VMEM((tb, D), self.q_scratch_dtype),                # q0
                pltpu.VMEM((tb, D), self.q_scratch_dtype),                # q0 + q1
            ],
        )

        loss_rows, center_part = pl.pallas_call(
            kernel,
            out_shape=(jax.ShapeDtypeStruct((B, 1), jnp.float32),
                       jax.ShapeDtypeStruct((nrt, 1, D), jnp.float32)),
            grid_spec=grid_spec,
            compiler_params=pltpu.CompilerParams(
                dimension_semantics=("parallel", "arbitrary"),
                vmem_limit_bytes=vmem_limit),
        )(inv_temp, student_output, teacher_output, teacher_output, self.center)

        # Tiny epilogue on (B,)- / (D,)-sized vectors: sign + normalization of the
        # loss, cross-row-tile reduce of the teacher sums, and the center EMA.
        loss = -jnp.sum(loss_rows) / float(B * n_loss_terms)
        batch_center = jnp.sum(center_part, axis=0) / float(2 * B)        # (1, D)
        # TODO(synk): all-reduce batch_center across data-parallel replicas here.
        self.center = (self.center * self.center_momentum
                       + batch_center * (1.0 - self.center_momentum))
        return loss


def _reference(student_output, teacher_output, center, temp,
               ncrops, student_temp, center_momentum):
    """Pure-JAX reference mirroring the PyTorch forward."""
    B = student_output.shape[0] // ncrops
    student = student_output / student_temp
    t = (teacher_output - center) / temp
    q_all = jax.nn.softmax(t, axis=-1)
    total, n = 0.0, 0
    for iq in range(2):
        q = q_all[iq * B:(iq + 1) * B]
        for v in range(ncrops):
            if v == iq:
                continue
            logp = jax.nn.log_softmax(student[v * B:(v + 1) * B], axis=-1)
            total = total + jnp.mean(jnp.sum(-q * logp, axis=-1))
            n += 1
    total = total / n
    batch_center = jnp.sum(teacher_output, axis=0, keepdims=True) / teacher_output.shape[0]
    new_center = center * center_momentum + batch_center * (1 - center_momentum)
    return total, new_center


if __name__ == "__main__":
    out_dim = 128
    ncrops = 4
    B = 8                                   # batch per crop

    loss_mod = DINOLossPallas(
        out_dim=out_dim, ncrops=ncrops,
        warmup_teacher_temp=0.04, teacher_temp=0.07,
        warmup_teacher_temp_epochs=5, nepochs=20,
        student_temp=0.1, center_momentum=0.9)

    key = jax.random.PRNGKey(0)
    k1, k2 = jax.random.split(key)
    student_output = jax.random.normal(k1, (ncrops * B, out_dim), jnp.float32)
    teacher_output = jax.random.normal(k2, (2 * B, out_dim), jnp.float32)
    epoch = 3

    center_before = jnp.array(loss_mod.center)

    loss = loss_mod(student_output, teacher_output, epoch)
    jax.block_until_ready(loss)
    jax.block_until_ready(loss_mod.center)

    ref_loss, ref_center = _reference(
        student_output, teacher_output, center_before,
        float(loss_mod.teacher_temp_schedule[epoch]),
        ncrops, loss_mod.student_temp, loss_mod.center_momentum)

    # bf16 teacher-probability scratch + approx reciprocal => ~1e-3-level loss tol.
    assert jnp.allclose(loss, ref_loss, rtol=5e-3, atol=5e-3), (loss, ref_loss)
    # Center path is exact f32 (only summation-order differences).
    assert jnp.allclose(loss_mod.center, ref_center, rtol=1e-5, atol=1e-6), (
        loss_mod.center, ref_center)

    print("KERNEL_OK")
</pallas_src>

<mosaic_0001>
module attributes {stable_mosaic.version = 11 : i64} {
  func.func @kernel(%arg0: i32, %arg1: i32, %arg2: memref<1x1xf32, #tpu.memory_space<smem>>, %arg3: memref<8x128xf32, #tpu.memory_space<vmem>>, %arg4: memref<8x128xf32, #tpu.memory_space<vmem>>, %arg5: memref<8x128xf32, #tpu.memory_space<vmem>>, %arg6: memref<1x128xf32, #tpu.memory_space<vmem>>, %arg7: memref<8x1xf32, #tpu.memory_space<vmem>>, %arg8: memref<1x1x128xf32, #tpu.memory_space<vmem>>, %arg9: memref<8x128xbf16, #tpu.memory_space<vmem>>, %arg10: memref<8x128xbf16, #tpu.memory_space<vmem>>) attributes {dimension_semantics = [#tpu.dimension_semantics<parallel>, #tpu.dimension_semantics<arbitrary>], iteration_bounds = array<i64: 1, 4>, scalar_prefetch = 0 : i64, scratch_operands = 2 : i64, tpu.core_type = #tpu.core_type<tc>, window_params = [{transform_indices = @transform_0, window_bounds = array<i64: 1, 1>}, {transform_indices = @transform_1, window_bounds = array<i64: 8, 128>}, {transform_indices = @transform_2, window_bounds = array<i64: 8, 128>}, {transform_indices = @transform_3, window_bounds = array<i64: 8, 128>}, {pipeline_mode = #tpu.pipeline_mode<synchronous>, transform_indices = @transform_4, window_bounds = array<i64: 1, 128>}, {transform_indices = @transform_5, window_bounds = array<i64: 8, 1>}, {transform_indices = @transform_6, window_bounds = array<i64: 1, 1, 128>}]} {
    %c0 = arith.constant 0 : index
    %c0_0 = arith.constant 0 : index
    %0 = vector.load %arg3[%c0, %c0_0] : memref<8x128xf32, #tpu.memory_space<vmem>>, vector<8x128xf32>
    %cst = arith.constant 1.000000e+01 : f32
    %1 = vector.broadcast %cst : f32 to vector<8x128xf32>
    %2 = arith.mulf %0, %1 : vector<8x128xf32>
    %cst_1 = arith.constant dense<0xFF800000> : vector<8xf32>
    %3 = vector.multi_reduction <maximumf>, %2, %cst_1 [1] : vector<8x128xf32> to vector<8xf32>
    %4 = vector.shape_cast %3 : vector<8xf32> to vector<8x1xf32>
    %5 = vector.broadcast %4 : vector<8x1xf32> to vector<8x128xf32>
    %6 = arith.subf %2, %5 : vector<8x128xf32>
    %7 = math.exp %6 : vector<8x128xf32>
    %cst_2 = arith.constant dense<0.000000e+00> : vector<8xf32>
    %8 = vector.multi_reduction <add>, %7, %cst_2 [1] : vector<8x128xf32> to vector<8xf32>
    %9 = vector.shape_cast %8 : vector<8xf32> to vector<8x1xf32>
    %10 = math.log %9 : vector<8x1xf32>
    %11 = vector.broadcast %10 : vector<8x1xf32> to vector<8x128xf32>
    %12 = arith.subf %6, %11 : vector<8x128xf32>
    %c0_i32 = arith.constant 0 : i32
    %13 = arith.cmpi eq, %arg1, %c0_i32 : i32
    %14 = arith.extui %13 : i1 to i32
    %c0_i32_3 = arith.constant 0 : i32
    %15 = arith.cmpi ne, %14, %c0_i32_3 : i32
    scf.if %15 {
      %c0_6 = arith.constant 0 : index
      %c0_7 = arith.constant 0 : index
      %22 = vector.load %arg4[%c0_6, %c0_7] : memref<8x128xf32, #tpu.memory_space<vmem>>, vector<8x128xf32>
      %c0_8 = arith.constant 0 : index
      %c0_9 = arith.constant 0 : index
      %23 = vector.load %arg5[%c0_8, %c0_9] : memref<8x128xf32, #tpu.memory_space<vmem>>, vector<8x128xf32>
      %c0_10 = arith.constant 0 : index
      %c0_11 = arith.constant 0 : index
      %24 = vector.load %arg6[%c0_10, %c0_11] : memref<1x128xf32, #tpu.memory_space<vmem>>, vector<1x128xf32>
      %c0_12 = arith.constant 0 : index
      %c0_13 = arith.constant 0 : index
      %25 = memref.load %arg2[%c0_12, %c0_13] : memref<1x1xf32, #tpu.memory_space<smem>>
      %cst_14 = arith.constant dense<0.000000e+00> : vector<128xf32>
      %26 = vector.multi_reduction <add>, %22, %cst_14 [0] : vector<8x128xf32> to vector<128xf32>
      %27 = vector.shape_cast %26 : vector<128xf32> to vector<1x128xf32>
      %cst_15 = arith.constant dense<0.000000e+00> : vector<128xf32>
      %28 = vector.multi_reduction <add>, %23, %cst_15 [0] : vector<8x128xf32> to vector<128xf32>
      %29 = vector.shape_cast %28 : vector<128xf32> to vector<1x128xf32>
      %30 = arith.addf %27, %29 : vector<1x128xf32>
      %31 = vector.shape_cast %30 : vector<1x128xf32> to vector<1x1x128xf32>
      %c0_16 = arith.constant 0 : index
      %c0_17 = arith.constant 0 : index
      %c0_18 = arith.constant 0 : index
      %32 = vector.load %arg8[%c0_16, %c0_17, %c0_18] : memref<1x1x128xf32, #tpu.memory_space<vmem>>, vector<1x1x128xf32>
      tpu.vector_store %arg8[%c0_16, %c0_17, %c0_18], %31 {strides = array<i32>} : memref<1x1x128xf32, #tpu.memory_space<vmem>>, vector<1x1x128xf32>,
      %33 = vector.broadcast %24 : vector<1x128xf32> to vector<8x128xf32>
      %34 = arith.subf %22, %33 : vector<8x128xf32>
      %35 = vector.broadcast %25 : f32 to vector<8x128xf32>
      %36 = arith.mulf %34, %35 : vector<8x128xf32>
      %cst_19 = arith.constant dense<0xFF800000> : vector<8xf32>
      %37 = vector.multi_reduction <maximumf>, %36, %cst_19 [1] : vector<8x128xf32> to vector<8xf32>
      %38 = vector.shape_cast %37 : vector<8xf32> to vector<8x1xf32>
      %39 = vector.broadcast %38 : vector<8x1xf32> to vector<8x128xf32>
      %40 = arith.subf %36, %39 : vector<8x128xf32>
      %41 = math.exp %40 : vector<8x128xf32>
      %cst_20 = arith.constant dense<0.000000e+00> : vector<8xf32>
      %42 = vector.multi_reduction <add>, %41, %cst_20 [1] : vector<8x128xf32> to vector<8xf32>
      %43 = vector.shape_cast %42 : vector<8xf32> to vector<8x1xf32>
      %44 = tpu.reciprocal %43 {approx = true} : vector<8x1xf32> -> vector<8x1xf32>
      %45 = vector.broadcast %44 : vector<8x1xf32> to vector<8x128xf32>
      %46 = arith.mulf %41, %45 : vector<8x128xf32>
      %47 = vector.broadcast %24 : vector<1x128xf32> to vector<8x128xf32>
      %48 = arith.subf %23, %47 : vector<8x128xf32>
      %49 = vector.broadcast %25 : f32 to vector<8x128xf32>
      %50 = arith.mulf %48, %49 : vector<8x128xf32>
      %cst_21 = arith.constant dense<0xFF800000> : vector<8xf32>
      %51 = vector.multi_reduction <maximumf>, %50, %cst_21 [1] : vector<8x128xf32> to vector<8xf32>
      %52 = vector.shape_cast %51 : vector<8xf32> to vector<8x1xf32>
      %53 = vector.broadcast %52 : vector<8x1xf32> to vector<8x128xf32>
      %54 = arith.subf %50, %53 : vector<8x128xf32>
      %55 = math.exp %54 : vector<8x128xf32>
      %cst_22 = arith.constant dense<0.000000e+00> : vector<8xf32>
      %56 = vector.multi_reduction <add>, %55, %cst_22 [1] : vector<8x128xf32> to vector<8xf32>
      %57 = vector.shape_cast %56 : vector<8xf32> to vector<8x1xf32>
      %58 = tpu.reciprocal %57 {approx = true} : vector<8x1xf32> -> vector<8x1xf32>
      %59 = vector.broadcast %58 : vector<8x1xf32> to vector<8x128xf32>
      %60 = arith.mulf %55, %59 : vector<8x128xf32>
      %61 = arith.truncf %46 : vector<8x128xf32> to vector<8x128xbf16>
      %c0_23 = arith.constant 0 : index
      %c0_24 = arith.constant 0 : index
      %62 = vector.load %arg9[%c0_23, %c0_24] : memref<8x128xbf16, #tpu.memory_space<vmem>>, vector<8x128xbf16>
      tpu.vector_store %arg9[%c0_23, %c0_24], %61 {strides = array<i32>} : memref<8x128xbf16, #tpu.memory_space<vmem>>, vector<8x128xbf16>,
      %63 = arith.addf %46, %60 : vector<8x128xf32>
      %64 = arith.truncf %63 : vector<8x128xf32> to vector<8x128xbf16>
      %c0_25 = arith.constant 0 : index
      %c0_26 = arith.constant 0 : index
      %65 = vector.load %arg10[%c0_25, %c0_26] : memref<8x128xbf16, #tpu.memory_space<vmem>>, vector<8x128xbf16>
      tpu.vector_store %arg10[%c0_25, %c0_26], %64 {strides = array<i32>} : memref<8x128xbf16, #tpu.memory_space<vmem>>, vector<8x128xbf16>,
      %66 = arith.mulf %60, %12 : vector<8x128xf32>
      %cst_27 = arith.constant dense<0.000000e+00> : vector<8xf32>
      %67 = vector.multi_reduction <add>, %66, %cst_27 [1] : vector<8x128xf32> to vector<8xf32>
      %68 = vector.shape_cast %67 : vector<8xf32> to vector<8x1xf32>
      %c0_28 = arith.constant 0 : index
      %c0_29 = arith.constant 0 : index
      %69 = vector.load %arg7[%c0_28, %c0_29] : memref<8x1xf32, #tpu.memory_space<vmem>>, vector<8x1xf32>
      tpu.vector_store %arg7[%c0_28, %c0_29], %68 {strides = array<i32>} : memref<8x1xf32, #tpu.memory_space<vmem>>, vector<8x1xf32>,
    } else {
    }
    %c1_i32 = arith.constant 1 : i32
    %16 = arith.cmpi eq, %arg1, %c1_i32 : i32
    %17 = arith.extui %16 : i1 to i32
    %c0_i32_4 = arith.constant 0 : i32
    %18 = arith.cmpi ne, %17, %c0_i32_4 : i32
    scf.if %18 {
      %c0_6 = arith.constant 0 : index
      %c0_7 = arith.constant 0 : index
      %22 = vector.load %arg7[%c0_6, %c0_7] : memref<8x1xf32, #tpu.memory_space<vmem>>, vector<8x1xf32>
      %c0_8 = arith.constant 0 : index
      %c0_9 = arith.constant 0 : index
      %23 = vector.load %arg9[%c0_8, %c0_9] : memref<8x128xbf16, #tpu.memory_space<vmem>>, vector<8x128xbf16>
      %24 = arith.extf %23 : vector<8x128xbf16> to vector<8x128xf32>
      %25 = arith.mulf %24, %12 : vector<8x128xf32>
      %cst_10 = arith.constant dense<0.000000e+00> : vector<8xf32>
      %26 = vector.multi_reduction <add>, %25, %cst_10 [1] : vector<8x128xf32> to vector<8xf32>
      %27 = vector.shape_cast %26 : vector<8xf32> to vector<8x1xf32>
      %28 = arith.addf %22, %27 : vector<8x1xf32>
      %c0_11 = arith.constant 0 : index
      %c0_12 = arith.constant 0 : index
      %29 = vector.load %arg7[%c0_11, %c0_12] : memref<8x1xf32, #tpu.memory_space<vmem>>, vector<8x1xf32>
      tpu.vector_store %arg7[%c0_11, %c0_12], %28 {strides = array<i32>} : memref<8x1xf32, #tpu.memory_space<vmem>>, vector<8x1xf32>,
    } else {
    }
    %c2_i32 = arith.constant 2 : i32
    %19 = arith.cmpi sge, %arg1, %c2_i32 : i32
    %20 = arith.extui %19 : i1 to i32
    %c0_i32_5 = arith.constant 0 : i32
    %21 = arith.cmpi ne, %20, %c0_i32_5 : i32
    scf.if %21 {
      %c0_6 = arith.constant 0 : index
      %c0_7 = arith.constant 0 : index
      %22 = vector.load %arg7[%c0_6, %c0_7] : memref<8x1xf32, #tpu.memory_space<vmem>>, vector<8x1xf32>
      %c0_8 = arith.constant 0 : index
      %c0_9 = arith.constant 0 : index
      %23 = vector.load %arg10[%c0_8, %c0_9] : memref<8x128xbf16, #tpu.memory_space<vmem>>, vector<8x128xbf16>
      %24 = arith.extf %23 : vector<8x128xbf16> to vector<8x128xf32>
      %25 = arith.mulf %24, %12 : vector<8x128xf32>
      %cst_10 = arith.constant dense<0.000000e+00> : vector<8xf32>
      %26 = vector.multi_reduction <add>, %25, %cst_10 [1] : vector<8x128xf32> to vector<8xf32>
      %27 = vector.shape_cast %26 : vector<8xf32> to vector<8x1xf32>
      %28 = arith.addf %22, %27 : vector<8x1xf32>
      %c0_11 = arith.constant 0 : index
      %c0_12 = arith.constant 0 : index
      %29 = vector.load %arg7[%c0_11, %c0_12] : memref<8x1xf32, #tpu.memory_space<vmem>>, vector<8x1xf32>
      tpu.vector_store %arg7[%c0_11, %c0_12], %28 {strides = array<i32>} : memref<8x1xf32, #tpu.memory_space<vmem>>, vector<8x1xf32>,
    } else {
    }
    return
  }
  func.func @transform_0(%arg0: i32, %arg1: i32) -> (i32, i32) {
    %c0_i32 = arith.constant 0 : i32
    %c0_i32_0 = arith.constant 0 : i32
    %c0_i32_1 = arith.constant 0 : i32
    return %c0_i32, %c0_i32_0 : i32, i32
  }
  func.func @transform_1(%arg0: i32, %arg1: i32) -> (i32, i32) {
    %c1_i32 = arith.constant 1 : i32
    %0 = arith.muli %arg1, %c1_i32 : i32
    %1 = arith.addi %0, %arg0 : i32
    %c0_i32 = arith.constant 0 : i32
    %c0_i32_0 = arith.constant 0 : i32
    return %1, %c0_i32 : i32, i32
  }
  func.func @transform_2(%arg0: i32, %arg1: i32) -> (i32, i32) {
    %c0_i32 = arith.constant 0 : i32
    %c0_i32_0 = arith.constant 0 : i32
    return %arg0, %c0_i32 : i32, i32
  }
  func.func @transform_3(%arg0: i32, %arg1: i32) -> (i32, i32) {
    %c1_i32 = arith.constant 1 : i32
    %0 = arith.addi %c1_i32, %arg0 : i32
    %c0_i32 = arith.constant 0 : i32
    %c0_i32_0 = arith.constant 0 : i32
    return %0, %c0_i32 : i32, i32
  }
  func.func @transform_4(%arg0: i32, %arg1: i32) -> (i32, i32) {
    %c0_i32 = arith.constant 0 : i32
    %c0_i32_0 = arith.constant 0 : i32
    %c0_i32_1 = arith.constant 0 : i32
    return %c0_i32, %c0_i32_0 : i32, i32
  }
  func.func @transform_5(%arg0: i32, %arg1: i32) -> (i32, i32) {
    %c0_i32 = arith.constant 0 : i32
    %c0_i32_0 = arith.constant 0 : i32
    return %arg0, %c0_i32 : i32, i32
  }
  func.func @transform_6(%arg0: i32, %arg1: i32) -> (i32, i32, i32) {
    %c0_i32 = arith.constant 0 : i32
    %c0_i32_0 = arith.constant 0 : i32
    %c0_i32_1 = arith.constant 0 : i32
    return %arg0, %c0_i32, %c0_i32_0 : i32, i32, i32
  }
}

</mosaic_0001>

<llo_original>
// kernel: tpu_custom_call.1
$region0: #{tpu_custom_call.1}
  #allocation0 [shape = 'u32[]', space=smem, size = 0x4, offset = 0x4, fixed_abs, tag = 'smem constant byte address 0x4 - core index']
  #allocation1 [shape = 'u32[144,128]{1,0:T(1,128)}', space=vmem, size = 0x12000, scoped, tag = 'internal scratch']
  #allocation2 [shape = 'bf16[8,128]{1,0:T(8,128)(2,1)}', space=vmem, size = 0x800, scoped, tag = 'scratch operand']
  #allocation3 [shape = 'bf16[8,128]{1,0:T(8,128)(2,1)}', space=vmem, size = 0x800, scoped, tag = 'scratch operand']
  #allocation4 [shape = 'f32[1,1]{1,0:T(1,128)S(6)}', space=smem, size = 0x200, scoped, tag = 'scoped memory for tpu_custom_call.1']
  %s0 = inlined_call_operand.<no memory space> [shape: f32[1,1], index: 0, kind: input, shape index: {}]
  %s1 = inlined_call_operand.hbm [shape: f32[32,128], index: 1, kind: input, shape index: {}]
  %s2 = inlined_call_operand.hbm [shape: f32[16,128], index: 2, kind: input, shape index: {}]
  %s3 = inlined_call_operand.hbm [shape: f32[16,128], index: 3, kind: input, shape index: {}]
  %s4 = inlined_call_operand.vmem [shape: f32[1,128], index: 4, kind: input, shape index: {}]
  %s5 = inlined_call_operand.vmem [shape: f32[8,1], index: 5, kind: output, shape index: {0}]
  %s6 = inlined_call_operand.hbm [shape: f32[1,1,128], index: 6, kind: output, shape index: {1}]
  %7 = xla_tuple %s5, %s6
  %s8 = sld [smem:[#allocation0]]
  $region85: #{tpu_custom_call.1} parent=0
    _
  %s10 = ssub.s32 1, %s8
  %s11 = scalar_select 0, %s10, %s8
  %12 = sst [smem:[#allocation4]] %s0
  $region1: #{tpu_custom_call.1} parent=0
    #allocation5 [shape = 'u8[8192]{0}', space=vmem, size = 0x2000, scoped, tag = 'input window, operand 1']
    #allocation6 [shape = 's32[2]{0}', space=sflag, size = 0x8, scoped, tag = 'scoped memory for tpu_custom_call.1']
    #allocation7 [shape = 's32[2]{0}', space=sflag, size = 0x8, scoped, tag = 'scoped memory for tpu_custom_call.1']
    #allocation8 [shape = 'u8[4096]{0}', space=vmem, size = 0x1000, scoped, tag = 'input window, operand 2, single buffered']
    #allocation9 [shape = 's32[1]{0}', space=sflag, size = 0x4, scoped, tag = 'scoped memory for tpu_custom_call.1']
    #allocation10 [shape = 'u8[4096]{0}', space=vmem, size = 0x1000, scoped, tag = 'input window, operand 3, single buffered']
    #allocation11 [shape = 'u8[512]{0}', space=vmem, size = 0x400, scoped, tag = 'output window, operand 1, single buffered']
    %13 = vsyncpa [#allocation6], 0
    %s14 = scalar_lea.sflag [#allocation6], 1
    %15 = vsyncpa %s14, 0
    %16 = vsyncpa [#allocation9], 0
    %17 = vsyncpa [#allocation7], 0
    loop: start=0, step=1, limit=6
    $region2: #{tpu_custom_call.1} parent=1 // loop_pre_header
      _
    $region3: #{tpu_custom_call.1} parent=1 // loop_header
      %s19 = sphi 0, %s23
      %p20 = scmp.ge.s32.totalorder %s19, 6
      %s26 = sphi 0, %s38
      %s27 = sphi 0, %s34
      %s28 = sphi 0, %s26
      %s29 = sphi 0, %s27
      %s30 = sphi 0, %s28
      %s31 = sphi 0, %s29
      %s39 = sphi 0, %s39
      %s41 = sphi 0, %s39
      %s42 = sphi 0, %s41
      %s56 = sphi 0, %s42
      %s64 = sphi 0, %s66
      %s67 = sphi 0, %s64
      %s68 = sphi 0, %s67
      %s84 = sphi 0, %s68
      %s90 = sphi 0, %s92
      %s93 = sphi 0, %s90
      %s94 = sphi 0, %s93
      %s110 = sphi 0, %s94
      %s118 = sphi 0, %s120
      %s121 = sphi 0, %s118
      %s122 = sphi 0, %s121
      %s138 = sphi 0, %s122
      %s142 = sphi 0, %s142
      %s144 = sphi 0, %s142
      %s145 = sphi 0, %s144
      %s159 = sphi 0, %s145
      %s165 = sphi 0, %s167
      %s168 = sphi 0, %s165
      %s169 = sphi 0, %s168
      %s185 = sphi 0, %s169
      %s191 = sphi 0, %s193
      %s194 = sphi 0, %s191
      %s195 = sphi 0, %s194
      %s211 = sphi 0, %s195
    $region4: #{tpu_custom_call.1} parent=1 // loop_header_branch
      %22 = sbr.rel (%p20) target = $region8
    $region5: #{tpu_custom_call.1} parent=1 // loop_body
      %s24 = ssub.s32 %s19, 1
      %s25 = ssub.s32 %s19, 2
      %s32 = sadd.s32 1, %s27
      %p33 = scmp.ge.s32.totalorder %s32, 4
      %s34 = scalar_select %p33, 0, %s32
      %s35 = sadd.s32 1, %s26
      %s36 = scalar_select %p33, %s35, %s26
      %p37 = scmp.ge.s32.totalorder %s36, 1
      %s38 = scalar_select %p37, 0, %s36
      %s40 = sadd.s32 %s39, 1
      %p43 = scmp.eq.s32.totalorder %s19, 3
      %p44 = scmp.ne.s32.totalorder %s39, %s41
      %p45 = scmp.eq.s32.totalorder %s19, 0
      %p46 = por %p44, %p45
      %p47 = scmp.ne.s32.totalorder %s39, %s41
      %p48 = scmp.eq.s32.totalorder %s24, 3
      %p49 = por %p47, %p48
      %p50 = scmp.ne.s32.totalorder %s41, %s42
      %p51 = scmp.eq.s32.totalorder %s24, 0
      %p52 = por %p50, %p51
      %p53 = scmp.ne.s32.totalorder %s41, %s42
      %p54 = scmp.eq.s32.totalorder %s25, 3
      %p55 = por %p53, %p54
      %p57 = scmp.ne.s32.totalorder %s42, %s56
      %p58 = scmp.eq.s32.totalorder %s25, 0
      %p59 = por %p57, %p58
      %s60 = sadd.s32 %s27, %s26
      %s61 = sadd.s32 %s34, %s38
      %s62 = ssub.s32 %s60, %s61
      %p63 = scmp.eq.s32.totalorder %s62, 0
      %s65 = sadd.s32 %s64, 1
      %s66 = scalar_select %p63, %s64, %s65
      %p69 = pneg %p63
      %p70 = scmp.eq.s32.totalorder %s19, 3
      %p71 = por %p69, %p70
      %p72 = scmp.ne.s32.totalorder %s64, %s67
      %p73 = scmp.eq.s32.totalorder %s19, 0
      %p74 = por %p72, %p73
      %p75 = scmp.ne.s32.totalorder %s64, %s67
      %p76 = scmp.eq.s32.totalorder %s24, 3
      %p77 = por %p75, %p76
      %p78 = scmp.ne.s32.totalorder %s67, %s68
      %p79 = scmp.eq.s32.totalorder %s24, 0
      %p80 = por %p78, %p79
      %p81 = scmp.ne.s32.totalorder %s67, %s68
      %p82 = scmp.eq.s32.totalorder %s25, 3
      %p83 = por %p81, %p82
      %p85 = scmp.ne.s32.totalorder %s68, %s84
      %p86 = scmp.eq.s32.totalorder %s25, 0
      %p87 = por %p85, %p86
      %s88 = ssub.s32 %s26, %s38
      %p89 = scmp.eq.s32.totalorder %s88, 0
      %s91 = sadd.s32 %s90, 1
      %s92 = scalar_select %p89, %s90, %s91
      %p95 = pneg %p89
      %p96 = scmp.eq.s32.totalorder %s19, 3
      %p97 = por %p95, %p96
      %p98 = scmp.ne.s32.totalorder %s90, %s93
      %p99 = scmp.eq.s32.totalorder %s19, 0
      %p100 = por %p98, %p99
      %p101 = scmp.ne.s32.totalorder %s90, %s93
      %p102 = scmp.eq.s32.totalorder %s24, 3
      %p103 = por %p101, %p102
      %p104 = scmp.ne.s32.totalorder %s93, %s94
      %p105 = scmp.eq.s32.totalorder %s24, 0
      %p106 = por %p104, %p105
      %p107 = scmp.ne.s32.totalorder %s93, %s94
      %p108 = scmp.eq.s32.totalorder %s25, 3
      %p109 = por %p107, %p108
      %p111 = scmp.ne.s32.totalorder %s94, %s110
      %p112 = scmp.eq.s32.totalorder %s25, 0
      %p113 = por %p111, %p112
      %s114 = sadd.s32 %s26, 1
      %s115 = sadd.s32 %s38, 1
      %s116 = ssub.s32 %s114, %s115
      %p117 = scmp.eq.s32.totalorder %s116, 0
      %s119 = sadd.s32 %s118, 1
      %s120 = scalar_select %p117, %s118, %s119
      %p123 = pneg %p117
      %p124 = scmp.eq.s32.totalorder %s19, 3
      %p125 = por %p123, %p124
      %p126 = scmp.ne.s32.totalorder %s118, %s121
      %p127 = scmp.eq.s32.totalorder %s19, 0
      %p128 = por %p126, %p127
      %p129 = scmp.ne.s32.totalorder %s118, %s121
      %p130 = scmp.eq.s32.totalorder %s24, 3
      %p131 = por %p129, %p130
      %p132 = scmp.ne.s32.totalorder %s121, %s122
      %p133 = scmp.eq.s32.totalorder %s24, 0
      %p134 = por %p132, %p133
      %p135 = scmp.ne.s32.totalorder %s121, %s122
      %p136 = scmp.eq.s32.totalorder %s25, 3
      %p137 = por %p135, %p136
      %p139 = scmp.ne.s32.totalorder %s122, %s138
      %p140 = scmp.eq.s32.totalorder %s25, 0
      %p141 = por %p139, %p140
      %s143 = sadd.s32 %s142, 1
      %p146 = scmp.eq.s32.totalorder %s19, 3
      %p147 = scmp.ne.s32.totalorder %s142, %s144
      %p148 = scmp.eq.s32.totalorder %s19, 0
      %p149 = por %p147, %p148
      %p150 = scmp.ne.s32.totalorder %s142, %s144
      %p151 = scmp.eq.s32.totalorder %s24, 3
      %p152 = por %p150, %p151
      %p153 = scmp.ne.s32.totalorder %s144, %s145
      %p154 = scmp.eq.s32.totalorder %s24, 0
      %p155 = por %p153, %p154
      %p156 = scmp.ne.s32.totalorder %s144, %s145
      %p157 = scmp.eq.s32.totalorder %s25, 3
      %p158 = por %p156, %p157
      %p160 = scmp.ne.s32.totalorder %s145, %s159
      %p161 = scmp.eq.s32.totalorder %s25, 0
      %p162 = por %p160, %p161
      %s163 = ssub.s32 %s26, %s38
      %p164 = scmp.eq.s32.totalorder %s163, 0
      %s166 = sadd.s32 %s165, 1
      %s167 = scalar_select %p164, %s165, %s166
      %p170 = pneg %p164
      %p171 = scmp.eq.s32.totalorder %s19, 3
      %p172 = por %p170, %p171
      %p173 = scmp.ne.s32.totalorder %s165, %s168
      %p174 = scmp.eq.s32.totalorder %s19, 0
      %p175 = por %p173, %p174
      %p176 = scmp.ne.s32.totalorder %s165, %s168
      %p177 = scmp.eq.s32.totalorder %s24, 3
      %p178 = por %p176, %p177
      %p179 = scmp.ne.s32.totalorder %s168, %s169
      %p180 = scmp.eq.s32.totalorder %s24, 0
      %p181 = por %p179, %p180
      %p182 = scmp.ne.s32.totalorder %s168, %s169
      %p183 = scmp.eq.s32.totalorder %s25, 3
      %p184 = por %p182, %p183
      %p186 = scmp.ne.s32.totalorder %s169, %s185
      %p187 = scmp.eq.s32.totalorder %s25, 0
      %p188 = por %p186, %p187
      %s189 = ssub.s32 %s26, %s38
      %p190 = scmp.eq.s32.totalorder %s189, 0
      %s192 = sadd.s32 %s191, 1
      %s193 = scalar_select %p190, %s191, %s192
      %p196 = pneg %p190
      %p197 = scmp.eq.s32.totalorder %s19, 3
      %p198 = por %p196, %p197
      %p199 = scmp.ne.s32.totalorder %s191, %s194
      %p200 = scmp.eq.s32.totalorder %s19, 0
      %p201 = por %p199, %p200
      %p202 = scmp.ne.s32.totalorder %s191, %s194
      %p203 = scmp.eq.s32.totalorder %s24, 3
      %p204 = por %p202, %p203
      %p205 = scmp.ne.s32.totalorder %s194, %s195
      %p206 = scmp.eq.s32.totalorder %s24, 0
      %p207 = por %p205, %p206
      %p208 = scmp.ne.s32.totalorder %s194, %s195
      %p209 = scmp.eq.s32.totalorder %s25, 3
      %p210 = por %p208, %p209
      %p212 = scmp.ne.s32.totalorder %s195, %s211
      %p213 = scmp.eq.s32.totalorder %s25, 0
      %p214 = por %p212, %p213
      %p215 = scmp.le.s32.totalorder 1, %s19
      %p216 = scmp.lt.s32.totalorder %s19, 5
      %p217 = pnand %p215, %p216
      %p218 = pneg %p217
      // Predicated region
      $region9: #{tpu_custom_call.1} parent=5 // pred_check
        _
      $region10: #{tpu_custom_call.1} parent=5 // pred_check_branch
        %220 = sbr.rel (%p217) target = $region12
      $region11: #{tpu_custom_call.1} parent=5 // pred_region
        %s221 = ssub.s32 %s19, 1
        // Predicated region
        $region13: #{tpu_custom_call.1} parent=11 // pred_check
          %p222 = pneg %p52
        $region14: #{tpu_custom_call.1} parent=11 // pred_check_branch
          %224 = sbr.rel (%p222) target = $region16
        $region15: #{tpu_custom_call.1} parent=11 // pred_region
          _
        $region16: #{tpu_custom_call.1} parent=11 // pred_fallthru
          _
        // Predicated region
        $region17: #{tpu_custom_call.1} parent=11 // pred_check
          %p225 = pneg %p106
        $region18: #{tpu_custom_call.1} parent=11 // pred_check_branch
          %227 = sbr.rel (%p225) target = $region20
        $region19: #{tpu_custom_call.1} parent=11 // pred_region
          %s229 = ssub.s32 128, 128
          %230 = vsyncadd [#allocation9], %s229
          %s231 = smul.addr %s28, 128
          %s232 = scalar_lea.hbm %s2, %s231
          %s234 = sshll.u32 [#allocation8], 4
          %s235 = int_to_ptr.vmem [resolvable:$true] %s234
          %237 = dma.hbm_to_vmem [thread:$0]  %s232, 128, %s235, [#allocation9]
        $region20: #{tpu_custom_call.1} parent=11 // pred_fallthru
          _
        // Predicated region
        $region21: #{tpu_custom_call.1} parent=11 // pred_check
          %p238 = pneg %p134
        $region22: #{tpu_custom_call.1} parent=11 // pred_check_branch
          %240 = sbr.rel (%p238) target = $region24
        $region23: #{tpu_custom_call.1} parent=11 // pred_region
          %s241 = sadd.s32 %s28, 1
          %s243 = ssub.s32 128, 128
          %244 = vsyncadd [#allocation9], %s243
          %s245 = smul.addr %s241, 128
          %s246 = scalar_lea.hbm %s3, %s245
          %s248 = sshll.u32 [#allocation10], 4
          %s249 = int_to_ptr.vmem [resolvable:$true] %s248
          %251 = dma.hbm_to_vmem [thread:$0]  %s246, 128, %s249, [#allocation9]
        $region24: #{tpu_custom_call.1} parent=11 // pred_fallthru
          _
        // Predicated region
        $region25: #{tpu_custom_call.1} parent=11 // pred_check
          %p252 = pneg %p155
        $region26: #{tpu_custom_call.1} parent=11 // pred_check_branch
          %254 = sbr.rel (%p252) target = $region28
        $region27: #{tpu_custom_call.1} parent=11 // pred_region
          _
        $region28: #{tpu_custom_call.1} parent=11 // pred_fallthru
          _
      $region12: #{tpu_custom_call.1} parent=5 // pred_fallthru
        _
      %p255 = scmp.lt.s32.totalorder %s19, 4
      // Predicated region
      $region29: #{tpu_custom_call.1} parent=5 // pred_check
        %p256 = pneg %p255
      $region30: #{tpu_custom_call.1} parent=5 // pred_check_branch
        %258 = sbr.rel (%p256) target = $region32
      $region31: #{tpu_custom_call.1} parent=5 // pred_region
        // Predicated region
        $region33: #{tpu_custom_call.1} parent=31 // pred_check
          %p259 = pneg %p74
        $region34: #{tpu_custom_call.1} parent=31 // pred_check_branch
          %261 = sbr.rel (%p259) target = $region36
        $region35: #{tpu_custom_call.1} parent=31 // pred_region
          %s262 = sand.u32 %s64, 1
          %s263 = scalar_lea.sflag [#allocation6], %s262
          %s264 = sand.u32 %s64, 1
          %s265 = smul.addr %s264, 8
          %s266 = scalar_lea.vmem [#allocation5], %s265
          %s267 = sadd.s32 %s27, %s26
          %s269 = ssub.s32 128, 128
          %270 = vsyncadd %s263, %s269
          %s271 = smul.addr %s267, 128
          %s272 = scalar_lea.hbm %s1, %s271
          %s274 = sshll.u32 %s266, 4
          %s275 = int_to_ptr.vmem [resolvable:$true] %s274
          %277 = dma.hbm_to_vmem [thread:$0]  %s272, 128, %s275, %s263
        $region36: #{tpu_custom_call.1} parent=31 // pred_fallthru
          _
      $region32: #{tpu_custom_call.1} parent=5 // pred_fallthru
        _
      %p278 = scmp.le.s32.totalorder 1, %s19
      %p279 = scmp.lt.s32.totalorder %s19, 5
      %p280 = pnand %p278, %p279
      %p281 = pneg %p280
      // Predicated region
      $region37: #{tpu_custom_call.1} parent=5 // pred_check
        _
      $region38: #{tpu_custom_call.1} parent=5 // pred_check_branch
        %283 = sbr.rel (%p280) target = $region40
      $region39: #{tpu_custom_call.1} parent=5 // pred_region
        %s284 = ssub.s32 %s19, 1
        %s285 = sand.u32 %s67, 1
        %s286 = scalar_lea.sflag [#allocation6], %s285
        %s287 = sand.u32 %s67, 1
        %s288 = smul.addr %s287, 8
        %s289 = scalar_lea.vmem [#allocation5], %s288
        // Predicated region
        $region41: #{tpu_custom_call.1} parent=39 // pred_check
          %p290 = pneg %p80
        $region42: #{tpu_custom_call.1} parent=39 // pred_check_branch
          %292 = sbr.rel (%p290) target = $region44
        $region43: #{tpu_custom_call.1} parent=39 // pred_region
          %293 = dma.done %s286, 128
        $region44: #{tpu_custom_call.1} parent=39 // pred_fallthru
          _
        // Predicated region
        $region45: #{tpu_custom_call.1} parent=39 // pred_check
          %p294 = pneg %p106
        $region46: #{tpu_custom_call.1} parent=39 // pred_check_branch
          %296 = sbr.rel (%p294) target = $region48
        $region47: #{tpu_custom_call.1} parent=39 // pred_region
          %297 = dma.done [#allocation9], 128
        $region48: #{tpu_custom_call.1} parent=39 // pred_fallthru
          _
        // Predicated region
        $region49: #{tpu_custom_call.1} parent=39 // pred_check
          %p298 = pneg %p134
        $region50: #{tpu_custom_call.1} parent=39 // pred_check_branch
          %300 = sbr.rel (%p298) target = $region52
        $region51: #{tpu_custom_call.1} parent=39 // pred_region
          %301 = dma.done [#allocation9], 128
        $region52: #{tpu_custom_call.1} parent=39 // pred_fallthru
          _
        %p302 = pneg %p52
        %p303 = pneg %p49
        %s304 = sand.u32 %s67, 1
        %s305 = scalar_lea.sflag [#allocation6], %s304
        %s306 = sand.u32 %s67, 1
        %s307 = smul.addr %s306, 8
        %s308 = scalar_lea.vmem [#allocation5], %s307
        %p309 = pneg %p80
        %p310 = pneg %p77
        %p311 = pneg %p106
        %p312 = pneg %p103
        %p313 = pneg %p134
        %p314 = pneg %p131
        %p315 = pneg %p155
        %p316 = pneg %p152
        %p317 = pneg %p181
        %p318 = pneg %p178
        %p319 = scmp.lt.s32.totalorder %s28, 0
        %s320 = scalar_select %p319, %s28, 0
        %s321 = smul.addr %s320, 8
        %s322 = scalar_lea.vmem %s5, %s321
        %p323 = pneg %p207
        %p324 = pneg %p204
        %s325 = sadd.s32 %s29, %s28
        %s326 = sadd.s32 %s28, 1
        %p327 = scmp.lt.s32.totalorder %s28, 0
        %s328 = scalar_select %p327, %s28, 0
        %s329 = smul.addr %s328, 8
        %s330 = scalar_lea.vmem %s5, %s329
        %v331 = vld [vmem:[%s289] sm:$0xff]
        %v332 = vmul.f32 %v331, 10.0
        %333 = vmax.xlane.f32.xlu0 %v332
        %v334 = vpop.xlane.xlu0 %333
        %v335 = vsub.f32 %v332, %v334
        %v336 = vmul.f32 %v335, 1.442695
        %v337 = vpow.pop %v336
        %338 = vadd.xlane.f32.xlu0 %v337
        %v339 = vpop.xlane.xlu0 %338
        %v340 = vlog2.pop %v339
        %v341 = vmul.f32 %v340, 0.6931472
        %v342 = vsub.f32 %v335, %v341
        %p343 = scmp.eq.s32.totalorder %s29, 0
        // Predicated region
        $region53: #{tpu_custom_call.1} parent=39 // pred_check
          %p344 = pneg %p343
        $region54: #{tpu_custom_call.1} parent=39 // pred_check_branch
          %346 = sbr.rel (%p344) target = $region56
        $region55: #{tpu_custom_call.1} parent=39 // pred_region
          %v347 = vld [vmem:[#allocation8] sm:$0xff]
          %v348 = vld [vmem:[#allocation10] sm:$0xff]
          %v349 = vld [vmem:[%s4] sm:$0x1]
          %s350 = sld [smem:[#allocation4]]
          %v351 = vrot.slane %v347, 4
          %v352 = vadd.f32 %v347, %v351
          %v353 = vrot.slane %v352, 2
          %v354 = vadd.f32 %v352, %v353
          %v355 = vrot.slane %v354, 1
          %v356 = vadd.f32 %v354, %v355
          %v357 = vrot.slane %v348, 4
          %v358 = vadd.f32 %v348, %v357
          %v359 = vrot.slane %v358, 2
          %v360 = vadd.f32 %v358, %v359
          %v361 = vrot.slane %v360, 1
          %v362 = vadd.f32 %v360, %v361
          %v363 = vadd.f32 %v356, %v362
          %364 = vst [vmem:[#allocation11] sm:$0x1] %v363
          %v366 = vlaneseq
          %v367 = vshrl.u32 %v366, 7
          %v368 = vsub.s32 0, %v367
          %v369 = vrot.slane %v349, %v368
          %v371 = vsub.f32 %v347, %v369
          %v372 = vstv %s350
          %v373 = vmul.f32 %v371, %v372
          %374 = vmax.xlane.f32.xlu0 %v373
          %v375 = vpop.xlane.xlu0 %374
          %v376 = vsub.f32 %v373, %v375
          %v377 = vmul.f32 %v376, 1.442695
          %v378 = vpow.pop %v377
          %379 = vadd.xlane.f32.xlu0 %v378
          %v380 = vpop.xlane.xlu0 %379
          %v381 = vrcp.pop %v380
          %v382 = vmul.f32 %v378, %v381
          %v383 = vsub.f32 %v348, %v369
          %v384 = vmul.f32 %v383, %v372
          %385 = vmax.xlane.f32.xlu0 %v384
          %v386 = vpop.xlane.xlu0 %385
          %v387 = vsub.f32 %v384, %v386
          %v388 = vmul.f32 %v387, 1.442695
          %v389 = vpow.pop %v388
          %390 = vadd.xlane.f32.xlu0 %v389
          %v391 = vpop.xlane.xlu0 %390
          %v392 = vrcp.pop %v391
          %v393 = vmul.f32 %v389, %v392
          %v394 = vpack.c.bf16 %v382, %v382
          %395 = vst [vmem:[#allocation2] sm:$0xf] %v394
          %v396 = vadd.f32 %v382, %v393
          %v397 = vpack.c.bf16 %v396, %v396
          %398 = vst [vmem:[#allocation3] sm:$0xf] %v397
          %v399 = vmul.f32 %v393, %v342
          %400 = vadd.xlane.f32.xlu0 %v399
          %v401 = vpop.xlane.xlu0 %400
          %vm402 = vcmask 7168
          %403 = vst.msk [vmem:[%s330] sm:$0xff] %vm402, %v401
        $region56: #{tpu_custom_call.1} parent=39 // pred_fallthru
          _
        %p404 = scmp.eq.s32.totalorder %s29, 1
        // Predicated region
        $region57: #{tpu_custom_call.1} parent=39 // pred_check
          %p405 = pneg %p404
        $region58: #{tpu_custom_call.1} parent=39 // pred_check_branch
          %407 = sbr.rel (%p405) target = $region60
        $region59: #{tpu_custom_call.1} parent=39 // pred_region
          %v408 = vld [vmem:[%s330] sm:$0xff]
          %v409 = vld [vmem:[#allocation2] sm:$0xf]
          %v410 = vunpack.c.l.bf16 %v409
          %v411 = vmul.f32 %v410, %v342
          %412 = vadd.xlane.f32.xlu0 %v411
          %v413 = vpop.xlane.xlu0 %412
          %v414 = vadd.f32 %v408, %v413
          %vm415 = vcmask 7168
          %416 = vst.msk [vmem:[%s330] sm:$0xff] %vm415, %v414
        $region60: #{tpu_custom_call.1} parent=39 // pred_fallthru
          _
        %p417 = scmp.ge.s32.totalorder %s29, 2
        // Predicated region
        $region61: #{tpu_custom_call.1} parent=39 // pred_check
          %p418 = pneg %p417
        $region62: #{tpu_custom_call.1} parent=39 // pred_check_branch
          %420 = sbr.rel (%p418) target = $region64
        $region63: #{tpu_custom_call.1} parent=39 // pred_region
          %v421 = vld [vmem:[%s330] sm:$0xff]
          %v422 = vld [vmem:[#allocation3] sm:$0xf]
          %v423 = vunpack.c.l.bf16 %v422
          %v424 = vmul.f32 %v423, %v342
          %425 = vadd.xlane.f32.xlu0 %v424
          %v426 = vpop.xlane.xlu0 %425
          %v427 = vadd.f32 %v421, %v426
          %vm428 = vcmask 7168
          %429 = vst.msk [vmem:[%s330] sm:$0xff] %vm428, %v427
        $region64: #{tpu_custom_call.1} parent=39 // pred_fallthru
          _
        %p430 = scmp.lt.s32.totalorder %s28, 0
        %s431 = scalar_select %p430, %s28, 0
        %s432 = smul.addr %s431, 8
        %s433 = scalar_lea.vmem %s5, %s432
        // Predicated region
        $region65: #{tpu_custom_call.1} parent=39 // pred_check
          %p434 = pneg %p178
        $region66: #{tpu_custom_call.1} parent=39 // pred_check_branch
          %436 = sbr.rel (%p434) target = $region68
        $region67: #{tpu_custom_call.1} parent=39 // pred_region
          _
        $region68: #{tpu_custom_call.1} parent=39 // pred_fallthru
          _
        // Predicated region
        $region69: #{tpu_custom_call.1} parent=39 // pred_check
          %p437 = pneg %p204
        $region70: #{tpu_custom_call.1} parent=39 // pred_check_branch
          %439 = sbr.rel (%p437) target = $region72
        $region71: #{tpu_custom_call.1} parent=39 // pred_region
          %s441 = ssub.s32 16, 16
          %442 = vsyncadd [#allocation7], %s441
          %s443 = smul.addr %s28, 16
          %s444 = scalar_lea.hbm %s6, %s443
          %s446 = sshll.u32 [#allocation11], 4
          %s447 = int_to_ptr.vmem [resolvable:$true] %s446
          %449 = dma.vmem_to_hbm [thread:$0]  %s447, 16, %s444, [#allocation7]
        $region72: #{tpu_custom_call.1} parent=39 // pred_fallthru
          _
        // Predicated region
        $region73: #{tpu_custom_call.1} parent=39 // pred_check
          %p450 = pneg %p178
        $region74: #{tpu_custom_call.1} parent=39 // pred_check_branch
          %452 = sbr.rel (%p450) target = $region76
        $region75: #{tpu_custom_call.1} parent=39 // pred_region
          %p453 = scmp.lt.s32.totalorder %s28, 0
          %s454 = scalar_select %p453, %s28, 0
          %s455 = smul.addr %s454, 8
          %s456 = scalar_lea.vmem %s5, %s455
        $region76: #{tpu_custom_call.1} parent=39 // pred_fallthru
          _
        // Predicated region
        $region77: #{tpu_custom_call.1} parent=39 // pred_check
          %p457 = pneg %p204
        $region78: #{tpu_custom_call.1} parent=39 // pred_check_branch
          %459 = sbr.rel (%p457) target = $region80
        $region79: #{tpu_custom_call.1} parent=39 // pred_region
          %460 = dma.done [#allocation7], 16
        $region80: #{tpu_custom_call.1} parent=39 // pred_fallthru
          _
      $region40: #{tpu_custom_call.1} parent=5 // pred_fallthru
        _
      %p461 = scmp.le.s32.totalorder 2, %s19
      // Predicated region
      $region81: #{tpu_custom_call.1} parent=5 // pred_check
        %p462 = pneg %p461
      $region82: #{tpu_custom_call.1} parent=5 // pred_check_branch
        %464 = sbr.rel (%p462) target = $region84
      $region83: #{tpu_custom_call.1} parent=5 // pred_region
        %s465 = ssub.s32 %s19, 2
      $region84: #{tpu_custom_call.1} parent=5 // pred_fallthru
        _
    $region6: #{tpu_custom_call.1} parent=1 // loop_footer
      %s23 = sadd.s32 1, %s19
    $region7: #{tpu_custom_call.1} parent=1 // loop_footer_branch
      %18 = sbr.rel target = $region3
    $region8: #{tpu_custom_call.1} parent=1 // loop_exit
      _
    %466 = vsyncpa [#allocation6], 1
    %s467 = scalar_lea.sflag [#allocation6], 1
    %468 = vsyncpa %s467, 1
    %469 = vsyncpa [#allocation9], 1
    %470 = vsyncpa [#allocation7], 1
    %s471 = scalar_lea.sflag [#allocation7], 1
    %472 = vsyncpa %s471, 1

</llo_original>
